<compile_context>
chip_gen: v5e
topology: v5e:2x2
jax: 0.10.0
libtpu: 0.0.40
codegen_flags: <defaults>
</compile_context>

<pallas_src>
import jax
import jax.numpy as jnp
from jax.experimental import pallas as pl
from jax.experimental.pallas import tpu as pltpu

NEG_SLOPE = 0.01   # torch.nn.LeakyReLU default
HIDDEN = 128


def _make_fusion_kernel(num_modalities):
    M = num_modalities

    def kernel(w1_ref, b1_ref, w2_ref, b2_ref, *rest):
        x_refs = rest[:M]
        fused_ref = rest[M]
        attn_ref = rest[M + 1]

        w1 = w1_ref[...]                      # (D, 128)
        b1 = b1_ref[...]                      # (1, 128)
        w2 = w2_ref[...]                      # (1, 128)  Linear(128->1) weight as a row
        b2 = b2_ref[0]                        # scalar from SMEM

        # --- per-modality attention logits ---------------------------------
        scores = []
        for m in range(M):
            x = x_refs[m][...].astype(jnp.float32)                      # (TB, D)
            # Linear(D -> 128) on the MXU, f32 accumulation.
            h = jnp.dot(x, w1, preferred_element_type=jnp.float32) + b1
            # LeakyReLU
            h = jnp.where(h > 0, h, NEG_SLOPE * h)
            # Linear(128 -> 1): VPU multiply + lane reduction (avoids N=1 MXU matmul).
            scores.append(jnp.sum(h * w2, axis=-1, keepdims=True) + b2)  # (TB, 1)

        # --- softmax over modalities (M is tiny & static; column-wise) -----
        s_max = scores[0]
        for m in range(1, M):
            s_max = jnp.maximum(s_max, scores[m])
        exps = [jnp.exp(s - s_max) for s in scores]                      # (TB, 1) each
        denom = exps[0]
        for m in range(1, M):
            denom = denom + exps[m]
        inv = pl.reciprocal(denom, approx=False)                         # exact: rows sum to 1
        attn_cols = [e * inv for e in exps]                              # (TB, 1) each

        # --- weighted fusion: re-read the VMEM-resident tiles (no live copies)
        fused = attn_cols[0] * x_refs[0][...].astype(jnp.float32)
        for m in range(1, M):
            fused = fused + attn_cols[m] * x_refs[m][...].astype(jnp.float32)
        fused_ref[...] = fused.astype(fused_ref.dtype)

        # --- lane-dense (TB, M) attention output, written per column -------
        for m in range(M):
            attn_ref[:, m:m + 1] = attn_cols[m].astype(attn_ref.dtype)

    return kernel


def _vmem_budgets():
    """(vmem_limit_bytes, tile_budget_bytes), generation-aware."""
    phys = 128 * 1024 * 1024
    try:
        info = pltpu.get_tpu_info()
        phys = int(getattr(info, "vmem_capacity_bytes", phys))
    except Exception:
        pass
    if phys >= 128 * 1024 * 1024:           # v5e / v6e: 128 MiB physical VMEM
        return 64 * 1024 * 1024, 40 * 1024 * 1024
    return 32 * 1024 * 1024, 18 * 1024 * 1024   # v7x: 64 MiB physical per TC


def _choose_block_b(B, M, D, feat_bytes, fused_bytes, tile_budget):
    """Pick the batch tile: as large as the VMEM budget allows (roofline sweet
    spot ~512-1024 rows), rounded to the packed-dtype sublane multiple, and
    capped at cdiv(B, 2) so the parallel batch grid has >= 2 steps."""
    sub = {1: 32, 2: 16}.get(feat_bytes, 8)
    if B <= 2 * sub:
        return B                                            # one small full-batch tile

    fixed = (D * HIDDEN + 2 * HIDDEN) * 4                   # W1 + b1 + w2 (single-buffered)
    per_row = (2 * M * D * feat_bytes                       # double-buffered feature tiles
               + 2 * (D * fused_bytes + M * 4)              # double-buffered outputs
               + D * 4                                      # one live f32 feature copy
               + M * HIDDEN * 4)                            # hidden activations (f32)
    tb = (tile_budget - fixed) // max(per_row, 1)
    tb = min(tb, pl.cdiv(B, 2), 1024)                       # >=2 grid steps; roofline cap
    tb = max(sub, (tb // sub) * sub)                        # packed-dtype sublane multiple
    return int(min(tb, B))


def _weight_spec(shape, single_buffer):
    """Grid-invariant operand: constant index_map; single-buffered if supported."""
    index_map = lambda b: (0, 0)
    if single_buffer and hasattr(pl, "Buffered"):
        try:
            return pl.BlockSpec(shape, index_map, pipeline_mode=pl.Buffered(1))
        except TypeError:
            pass
    return pl.BlockSpec(shape, index_map)


def fusion_layer(features_list, w1, b1, w2, b2, *, block_b=None,
                 fused_dtype=jnp.float32):
    """features_list: list of (B, D) arrays (f32 or bf16 — bf16 halves HBM bytes).
    Weights in JAX convention: w1 (D, 128), b1 (128,), w2 (128, 1), b2 (1,).
    Returns (fused (B, D) in `fused_dtype`, attn (B, M, 1) f32)."""
    M = len(features_list)
    feats = [jnp.asarray(f) for f in features_list]
    B, D = feats[0].shape
    feat_bytes = jnp.dtype(feats[0].dtype).itemsize
    fused_bytes = jnp.dtype(fused_dtype).itemsize

    vmem_limit, tile_budget = _vmem_budgets()
    if block_b is None:
        block_b = _choose_block_b(B, M, D, feat_bytes, fused_bytes, tile_budget)
    grid = (pl.cdiv(B, block_b),)
    # NOTE: a ragged last tile (B % block_b != 0) reads padded rows that go
    # through exp(); results are per-row and OOB writes are dropped, so valid
    # rows are unaffected.

    w1_f = jnp.asarray(w1, jnp.float32)                         # (D, 128)
    b1_2d = jnp.asarray(b1, jnp.float32).reshape(1, HIDDEN)     # (1, 128)
    w2_row = jnp.asarray(w2, jnp.float32).reshape(1, HIDDEN)    # (128,1) -> (1,128)
    b2_1d = jnp.asarray(b2, jnp.float32).reshape(1)             # scalar, lives in SMEM

    def run(single_buffer_weights):
        in_specs = [
            _weight_spec((D, HIDDEN), single_buffer_weights),       # W1 (VMEM-resident)
            _weight_spec((1, HIDDEN), single_buffer_weights),       # b1
            _weight_spec((1, HIDDEN), single_buffer_weights),       # W2 row
            pl.BlockSpec(memory_space=pltpu.MemorySpace.SMEM),      # b2 scalar
        ] + [pl.BlockSpec((block_b, D), lambda b: (b, 0))] * M      # features (streamed)
        out_specs = [
            pl.BlockSpec((block_b, D), lambda b: (b, 0)),           # fused
            pl.BlockSpec((block_b, M), lambda b: (b, 0)),           # attn, lane-dense 2-D
        ]
        out_shape = [
            jax.ShapeDtypeStruct((B, D), fused_dtype),
            jax.ShapeDtypeStruct((B, M), jnp.float32),
        ]
        return pl.pallas_call(
            _make_fusion_kernel(M),
            grid=grid,
            in_specs=in_specs,
            out_specs=out_specs,
            out_shape=out_shape,
            compiler_params=pltpu.CompilerParams(
                dimension_semantics=("parallel",),      # batch tiles are independent
                vmem_limit_bytes=vmem_limit,
            ),
        )(w1_f, b1_2d, w2_row, b2_1d, *feats)

    try:
        fused, attn2d = run(True)
    except Exception:
        # Fallback if this JAX build rejects single-buffered weight BlockSpecs.
        fused, attn2d = run(False)

    return fused, attn2d.reshape(B, M, 1)


def fusion_layer_ref(features_list, w1, b1, w2, b2):
    """Pure-JAX reference mirroring the PyTorch forward (f32 compute)."""
    x = jnp.stack(features_list, axis=1).astype(jnp.float32)    # (B, M, D)
    h = x @ w1 + b1.reshape(1, 1, HIDDEN)
    h = jnp.where(h > 0, h, NEG_SLOPE * h)
    s = h @ w2 + b2.reshape(1, 1, 1)                            # (B, M, 1)
    attn = jax.nn.softmax(s, axis=1)
    fused = jnp.sum(attn * x, axis=1)
    return fused, attn


if __name__ == "__main__":
    key = jax.random.PRNGKey(0)
    B, M, D = 2, 3, 32   # batch=2, num_modalities=3, latent_dim=32

    k_feat, k_w1, k_b1, k_w2, k_b2 = jax.random.split(key, 5)

    # Deterministic synthetic parameters (shapes from FusionLayer.__init__).
    w1 = jax.random.normal(k_w1, (D, HIDDEN), jnp.float32) * 0.1
    b1 = jax.random.normal(k_b1, (HIDDEN,), jnp.float32) * 0.1
    w2 = jax.random.normal(k_w2, (HIDDEN, 1), jnp.float32) * 0.1
    b2 = jax.random.normal(k_b2, (1,), jnp.float32) * 0.1

    feats = [jax.random.normal(jax.random.fold_in(k_feat, m), (B, D), jnp.float32)
             for m in range(M)]

    # --- f32 path -------------------------------------------------------
    fused, attn = fusion_layer(feats, w1, b1, w2, b2)
    jax.block_until_ready((fused, attn))

    fused_r, attn_r = fusion_layer_ref(feats, w1, b1, w2, b2)
    assert fused.shape == (B, D) and attn.shape == (B, M, 1)
    assert jnp.allclose(fused, fused_r, atol=1e-4, rtol=1e-4)
    assert jnp.allclose(attn, attn_r, atol=1e-4, rtol=1e-4)
    assert jnp.allclose(jnp.sum(attn, axis=1), 1.0, atol=1e-4)

    # --- bf16 features + bf16 fused output (halved HBM traffic) ----------
    feats_bf16 = [f.astype(jnp.bfloat16) for f in feats]
    fused_b, attn_b = fusion_layer(feats_bf16, w1, b1, w2, b2,
                                   fused_dtype=jnp.bfloat16)
    jax.block_until_ready((fused_b, attn_b))

    fused_rb, attn_rb = fusion_layer_ref(feats_bf16, w1, b1, w2, b2)
    assert fused_b.dtype == jnp.bfloat16 and fused_b.shape == (B, D)
    assert jnp.allclose(fused_b.astype(jnp.float32), fused_rb, atol=3e-2, rtol=3e-2)
    assert jnp.allclose(attn_b, attn_rb, atol=1e-4, rtol=1e-4)
    assert jnp.allclose(jnp.sum(attn_b, axis=1), 1.0, atol=1e-4)

    print("KERNEL_OK")
</pallas_src>

<mosaic_0001>
module attributes {stable_mosaic.version = 11 : i64} {
  func.func @kernel(%arg0: i32, %arg1: memref<32x128xf32, #tpu.memory_space<vmem>>, %arg2: memref<1x128xf32, #tpu.memory_space<vmem>>, %arg3: memref<1x128xf32, #tpu.memory_space<vmem>>, %arg4: memref<1xf32, #tpu.memory_space<smem>>, %arg5: memref<2x32xf32, #tpu.memory_space<vmem>>, %arg6: memref<2x32xf32, #tpu.memory_space<vmem>>, %arg7: memref<2x32xf32, #tpu.memory_space<vmem>>, %arg8: memref<2x32xf32, #tpu.memory_space<vmem>>, %arg9: memref<2x3xf32, #tpu.memory_space<vmem>>) attributes {dimension_semantics = [#tpu.dimension_semantics<parallel>], iteration_bounds = array<i64: 1>, scalar_prefetch = 0 : i64, scratch_operands = 0 : i64, tpu.core_type = #tpu.core_type<tc>, window_params = [{pipeline_mode = #tpu.pipeline_mode<synchronous>, transform_indices = @transform_0, window_bounds = array<i64: 32, 128>}, {pipeline_mode = #tpu.pipeline_mode<synchronous>, transform_indices = @transform_1, window_bounds = array<i64: 1, 128>}, {pipeline_mode = #tpu.pipeline_mode<synchronous>, transform_indices = @transform_2, window_bounds = array<i64: 1, 128>}, {transform_indices = @transform_3, window_bounds = array<i64: 1>}, {transform_indices = @transform_4, window_bounds = array<i64: 2, 32>}, {transform_indices = @transform_5, window_bounds = array<i64: 2, 32>}, {transform_indices = @transform_6, window_bounds = array<i64: 2, 32>}, {transform_indices = @transform_7, window_bounds = array<i64: 2, 32>}, {transform_indices = @transform_8, window_bounds = array<i64: 2, 3>}]} {
    %c0 = arith.constant 0 : index
    %c0_0 = arith.constant 0 : index
    %0 = vector.load %arg1[%c0, %c0_0] : memref<32x128xf32, #tpu.memory_space<vmem>>, vector<32x128xf32>
    %c0_1 = arith.constant 0 : index
    %c0_2 = arith.constant 0 : index
    %1 = vector.load %arg2[%c0_1, %c0_2] : memref<1x128xf32, #tpu.memory_space<vmem>>, vector<1x128xf32>
    %c0_3 = arith.constant 0 : index
    %c0_4 = arith.constant 0 : index
    %2 = vector.load %arg3[%c0_3, %c0_4] : memref<1x128xf32, #tpu.memory_space<vmem>>, vector<1x128xf32>
    %c0_5 = arith.constant 0 : index
    %3 = memref.load %arg4[%c0_5] : memref<1xf32, #tpu.memory_space<smem>>
    %c0_6 = arith.constant 0 : index
    %c0_7 = arith.constant 0 : index
    %4 = vector.load %arg5[%c0_6, %c0_7] : memref<2x32xf32, #tpu.memory_space<vmem>>, vector<2x32xf32>
    %cst = arith.constant dense<0.000000e+00> : vector<2x128xf32>
    %5 = tpu.matmul %4, %0, %cst {dimension_numbers = #tpu.dot_dimension_numbers<[1], [0], [0], [1], [0, 0, 1, 1], [], []>} : vector<2x32xf32>, vector<32x128xf32>, vector<2x128xf32> -> vector<2x128xf32>
    %6 = vector.broadcast %1 : vector<1x128xf32> to vector<2x128xf32>
    %7 = arith.addf %5, %6 : vector<2x128xf32>
    %cst_8 = arith.constant 0.000000e+00 : f32
    %8 = vector.broadcast %cst_8 : f32 to vector<2x128xf32>
    %9 = arith.cmpf ogt, %7, %8 : vector<2x128xf32>
    %cst_9 = arith.constant 0.00999999977 : f32
    %10 = vector.broadcast %cst_9 : f32 to vector<2x128xf32>
    %11 = arith.mulf %10, %7 : vector<2x128xf32>
    %12 = arith.select %9, %7, %11 : vector<2x128xi1>, vector<2x128xf32>
    %13 = vector.broadcast %2 : vector<1x128xf32> to vector<2x128xf32>
    %14 = arith.mulf %12, %13 : vector<2x128xf32>
    %cst_10 = arith.constant dense<0.000000e+00> : vector<2xf32>
    %15 = vector.multi_reduction <add>, %14, %cst_10 [1] : vector<2x128xf32> to vector<2xf32>
    %16 = vector.shape_cast %15 : vector<2xf32> to vector<2x1xf32>
    %17 = vector.broadcast %3 : f32 to vector<2x1xf32>
    %18 = arith.addf %16, %17 : vector<2x1xf32>
    %c0_11 = arith.constant 0 : index
    %c0_12 = arith.constant 0 : index
    %19 = vector.load %arg6[%c0_11, %c0_12] : memref<2x32xf32, #tpu.memory_space<vmem>>, vector<2x32xf32>
    %cst_13 = arith.constant dense<0.000000e+00> : vector<2x128xf32>
    %20 = tpu.matmul %19, %0, %cst_13 {dimension_numbers = #tpu.dot_dimension_numbers<[1], [0], [0], [1], [0, 0, 1, 1], [], []>} : vector<2x32xf32>, vector<32x128xf32>, vector<2x128xf32> -> vector<2x128xf32>
    %21 = vector.broadcast %1 : vector<1x128xf32> to vector<2x128xf32>
    %22 = arith.addf %20, %21 : vector<2x128xf32>
    %cst_14 = arith.constant 0.000000e+00 : f32
    %23 = vector.broadcast %cst_14 : f32 to vector<2x128xf32>
    %24 = arith.cmpf ogt, %22, %23 : vector<2x128xf32>
    %cst_15 = arith.constant 0.00999999977 : f32
    %25 = vector.broadcast %cst_15 : f32 to vector<2x128xf32>
    %26 = arith.mulf %25, %22 : vector<2x128xf32>
    %27 = arith.select %24, %22, %26 : vector<2x128xi1>, vector<2x128xf32>
    %28 = vector.broadcast %2 : vector<1x128xf32> to vector<2x128xf32>
    %29 = arith.mulf %27, %28 : vector<2x128xf32>
    %cst_16 = arith.constant dense<0.000000e+00> : vector<2xf32>
    %30 = vector.multi_reduction <add>, %29, %cst_16 [1] : vector<2x128xf32> to vector<2xf32>
    %31 = vector.shape_cast %30 : vector<2xf32> to vector<2x1xf32>
    %32 = vector.broadcast %3 : f32 to vector<2x1xf32>
    %33 = arith.addf %31, %32 : vector<2x1xf32>
    %c0_17 = arith.constant 0 : index
    %c0_18 = arith.constant 0 : index
    %34 = vector.load %arg7[%c0_17, %c0_18] : memref<2x32xf32, #tpu.memory_space<vmem>>, vector<2x32xf32>
    %cst_19 = arith.constant dense<0.000000e+00> : vector<2x128xf32>
    %35 = tpu.matmul %34, %0, %cst_19 {dimension_numbers = #tpu.dot_dimension_numbers<[1], [0], [0], [1], [0, 0, 1, 1], [], []>} : vector<2x32xf32>, vector<32x128xf32>, vector<2x128xf32> -> vector<2x128xf32>
    %36 = vector.broadcast %1 : vector<1x128xf32> to vector<2x128xf32>
    %37 = arith.addf %35, %36 : vector<2x128xf32>
    %cst_20 = arith.constant 0.000000e+00 : f32
    %38 = vector.broadcast %cst_20 : f32 to vector<2x128xf32>
    %39 = arith.cmpf ogt, %37, %38 : vector<2x128xf32>
    %cst_21 = arith.constant 0.00999999977 : f32
    %40 = vector.broadcast %cst_21 : f32 to vector<2x128xf32>
    %41 = arith.mulf %40, %37 : vector<2x128xf32>
    %42 = arith.select %39, %37, %41 : vector<2x128xi1>, vector<2x128xf32>
    %43 = vector.broadcast %2 : vector<1x128xf32> to vector<2x128xf32>
    %44 = arith.mulf %42, %43 : vector<2x128xf32>
    %cst_22 = arith.constant dense<0.000000e+00> : vector<2xf32>
    %45 = vector.multi_reduction <add>, %44, %cst_22 [1] : vector<2x128xf32> to vector<2xf32>
    %46 = vector.shape_cast %45 : vector<2xf32> to vector<2x1xf32>
    %47 = vector.broadcast %3 : f32 to vector<2x1xf32>
    %48 = arith.addf %46, %47 : vector<2x1xf32>
    %49 = arith.maximumf %18, %33 : vector<2x1xf32>
    %50 = arith.maximumf %49, %48 : vector<2x1xf32>
    %51 = arith.subf %18, %50 : vector<2x1xf32>
    %52 = math.exp %51 : vector<2x1xf32>
    %53 = arith.subf %33, %50 : vector<2x1xf32>
    %54 = math.exp %53 : vector<2x1xf32>
    %55 = arith.subf %48, %50 : vector<2x1xf32>
    %56 = math.exp %55 : vector<2x1xf32>
    %57 = arith.addf %52, %54 : vector<2x1xf32>
    %58 = arith.addf %57, %56 : vector<2x1xf32>
    %59 = tpu.reciprocal %58 : vector<2x1xf32> -> vector<2x1xf32>
    %60 = arith.mulf %52, %59 : vector<2x1xf32>
    %61 = arith.mulf %54, %59 : vector<2x1xf32>
    %62 = arith.mulf %56, %59 : vector<2x1xf32>
    %c0_23 = arith.constant 0 : index
    %c0_24 = arith.constant 0 : index
    %63 = vector.load %arg5[%c0_23, %c0_24] : memref<2x32xf32, #tpu.memory_space<vmem>>, vector<2x32xf32>
    %64 = vector.broadcast %60 : vector<2x1xf32> to vector<2x32xf32>
    %65 = arith.mulf %64, %63 : vector<2x32xf32>
    %c0_25 = arith.constant 0 : index
    %c0_26 = arith.constant 0 : index
    %66 = vector.load %arg6[%c0_25, %c0_26] : memref<2x32xf32, #tpu.memory_space<vmem>>, vector<2x32xf32>
    %67 = vector.broadcast %61 : vector<2x1xf32> to vector<2x32xf32>
    %68 = arith.mulf %67, %66 : vector<2x32xf32>
    %69 = arith.addf %65, %68 : vector<2x32xf32>
    %c0_27 = arith.constant 0 : index
    %c0_28 = arith.constant 0 : index
    %70 = vector.load %arg7[%c0_27, %c0_28] : memref<2x32xf32, #tpu.memory_space<vmem>>, vector<2x32xf32>
    %71 = vector.broadcast %62 : vector<2x1xf32> to vector<2x32xf32>
    %72 = arith.mulf %71, %70 : vector<2x32xf32>
    %73 = arith.addf %69, %72 : vector<2x32xf32>
    %c0_29 = arith.constant 0 : index
    %c0_30 = arith.constant 0 : index
    %74 = vector.load %arg8[%c0_29, %c0_30] : memref<2x32xf32, #tpu.memory_space<vmem>>, vector<2x32xf32>
    tpu.vector_store %arg8[%c0_29, %c0_30], %73 {strides = array<i32>} : memref<2x32xf32, #tpu.memory_space<vmem>>, vector<2x32xf32>,
    %c0_31 = arith.constant 0 : index
    %c0_32 = arith.constant 0 : index
    %75 = vector.load %arg9[%c0_31, %c0_32] : memref<2x3xf32, #tpu.memory_space<vmem>>, vector<2x1xf32>
    tpu.vector_store %arg9[%c0_31, %c0_32], %60 {strides = array<i32>} : memref<2x3xf32, #tpu.memory_space<vmem>>, vector<2x1xf32>,
    %c0_33 = arith.constant 0 : index
    %c1 = arith.constant 1 : index
    %76 = vector.load %arg9[%c0_33, %c1] : memref<2x3xf32, #tpu.memory_space<vmem>>, vector<2x1xf32>
    tpu.vector_store %arg9[%c0_33, %c1], %61 {strides = array<i32>} : memref<2x3xf32, #tpu.memory_space<vmem>>, vector<2x1xf32>,
    %c0_34 = arith.constant 0 : index
    %c2 = arith.constant 2 : index
    %77 = vector.load %arg9[%c0_34, %c2] : memref<2x3xf32, #tpu.memory_space<vmem>>, vector<2x1xf32>
    tpu.vector_store %arg9[%c0_34, %c2], %62 {strides = array<i32>} : memref<2x3xf32, #tpu.memory_space<vmem>>, vector<2x1xf32>,
    return
  }
  func.func @transform_0(%arg0: i32) -> (i32, i32) {
    %c0_i32 = arith.constant 0 : i32
    %c0_i32_0 = arith.constant 0 : i32
    %c0_i32_1 = arith.constant 0 : i32
    return %c0_i32, %c0_i32_0 : i32, i32
  }
  func.func @transform_1(%arg0: i32) -> (i32, i32) {
    %c0_i32 = arith.constant 0 : i32
    %c0_i32_0 = arith.constant 0 : i32
    %c0_i32_1 = arith.constant 0 : i32
    return %c0_i32, %c0_i32_0 : i32, i32
  }
  func.func @transform_2(%arg0: i32) -> (i32, i32) {
    %c0_i32 = arith.constant 0 : i32
    %c0_i32_0 = arith.constant 0 : i32
    %c0_i32_1 = arith.constant 0 : i32
    return %c0_i32, %c0_i32_0 : i32, i32
  }
  func.func @transform_3(%arg0: i32) -> i32 {
    %c0_i32 = arith.constant 0 : i32
    %c0_i32_0 = arith.constant 0 : i32
    return %c0_i32 : i32
  }
  func.func @transform_4(%arg0: i32) -> (i32, i32) {
    %c0_i32 = arith.constant 0 : i32
    %c0_i32_0 = arith.constant 0 : i32
    return %arg0, %c0_i32 : i32, i32
  }
  func.func @transform_5(%arg0: i32) -> (i32, i32) {
    %c0_i32 = arith.constant 0 : i32
    %c0_i32_0 = arith.constant 0 : i32
    return %arg0, %c0_i32 : i32, i32
  }
  func.func @transform_6(%arg0: i32) -> (i32, i32) {
    %c0_i32 = arith.constant 0 : i32
    %c0_i32_0 = arith.constant 0 : i32
    return %arg0, %c0_i32 : i32, i32
  }
  func.func @transform_7(%arg0: i32) -> (i32, i32) {
    %c0_i32 = arith.constant 0 : i32
    %c0_i32_0 = arith.constant 0 : i32
    return %arg0, %c0_i32 : i32, i32
  }
  func.func @transform_8(%arg0: i32) -> (i32, i32) {
    %c0_i32 = arith.constant 0 : i32
    %c0_i32_0 = arith.constant 0 : i32
    return %arg0, %c0_i32 : i32, i32
  }
}

module attributes {stable_mosaic.version = 11 : i64} {
  func.func @kernel(%arg0: i32, %arg1: memref<32x128xf32, #tpu.memory_space<vmem>>, %arg2: memref<1x128xf32, #tpu.memory_space<vmem>>, %arg3: memref<1x128xf32, #tpu.memory_space<vmem>>, %arg4: memref<1xf32, #tpu.memory_space<smem>>, %arg5: memref<2x32xf32, #tpu.memory_space<vmem>>, %arg6: memref<2x32xf32, #tpu.memory_space<vmem>>, %arg7: memref<2x32xf32, #tpu.memory_space<vmem>>, %arg8: memref<2x32xf32, #tpu.memory_space<vmem>>, %arg9: memref<2x3xf32, #tpu.memory_space<vmem>>) attributes {dimension_semantics = [#tpu.dimension_semantics<parallel>], iteration_bounds = array<i64: 1>, scalar_prefetch = 0 : i64, scratch_operands = 0 : i64, tpu.core_type = #tpu.core_type<tc>, window_params = [{pipeline_mode = #tpu.pipeline_mode<synchronous>, transform_indices = @transform_0, window_bounds = array<i64: 32, 128>}, {pipeline_mode = #tpu.pipeline_mode<synchronous>, transform_indices = @transform_1, window_bounds = array<i64: 1, 128>}, {pipeline_mode = #tpu.pipeline_mode<synchronous>, transform_indices = @transform_2, window_bounds = array<i64: 1, 128>}, {transform_indices = @transform_3, window_bounds = array<i64: 1>}, {transform_indices = @transform_4, window_bounds = array<i64: 2, 32>}, {transform_indices = @transform_5, window_bounds = array<i64: 2, 32>}, {transform_indices = @transform_6, window_bounds = array<i64: 2, 32>}, {transform_indices = @transform_7, window_bounds = array<i64: 2, 32>}, {transform_indices = @transform_8, window_bounds = array<i64: 2, 3>}]} {
    %c0 = arith.constant 0 : index
    %c0_0 = arith.constant 0 : index
    %0 = vector.load %arg1[%c0, %c0_0] : memref<32x128xf32, #tpu.memory_space<vmem>>, vector<32x128xf32>
    %c0_1 = arith.constant 0 : index
    %c0_2 = arith.constant 0 : index
    %1 = vector.load %arg2[%c0_1, %c0_2] : memref<1x128xf32, #tpu.memory_space<vmem>>, vector<1x128xf32>
    %c0_3 = arith.constant 0 : index
    %c0_4 = arith.constant 0 : index
    %2 = vector.load %arg3[%c0_3, %c0_4] : memref<1x128xf32, #tpu.memory_space<vmem>>, vector<1x128xf32>
    %c0_5 = arith.constant 0 : index
    %3 = memref.load %arg4[%c0_5] : memref<1xf32, #tpu.memory_space<smem>>
    %c0_6 = arith.constant 0 : index
    %c0_7 = arith.constant 0 : index
    %4 = vector.load %arg5[%c0_6, %c0_7] : memref<2x32xf32, #tpu.memory_space<vmem>>, vector<2x32xf32>
    %cst = arith.constant dense<0.000000e+00> : vector<2x128xf32>
    %5 = tpu.matmul %4, %0, %cst {dimension_numbers = #tpu.dot_dimension_numbers<[1], [0], [0], [1], [0, 0, 1, 1], [], []>} : vector<2x32xf32>, vector<32x128xf32>, vector<2x128xf32> -> vector<2x128xf32>
    %6 = vector.broadcast %1 : vector<1x128xf32> to vector<2x128xf32>
    %7 = arith.addf %5, %6 : vector<2x128xf32>
    %cst_8 = arith.constant 0.000000e+00 : f32
    %8 = vector.broadcast %cst_8 : f32 to vector<2x128xf32>
    %9 = arith.cmpf ogt, %7, %8 : vector<2x128xf32>
    %cst_9 = arith.constant 0.00999999977 : f32
    %10 = vector.broadcast %cst_9 : f32 to vector<2x128xf32>
    %11 = arith.mulf %10, %7 : vector<2x128xf32>
    %12 = arith.select %9, %7, %11 : vector<2x128xi1>, vector<2x128xf32>
    %13 = vector.broadcast %2 : vector<1x128xf32> to vector<2x128xf32>
    %14 = arith.mulf %12, %13 : vector<2x128xf32>
    %cst_10 = arith.constant dense<0.000000e+00> : vector<2xf32>
    %15 = vector.multi_reduction <add>, %14, %cst_10 [1] : vector<2x128xf32> to vector<2xf32>
    %16 = vector.shape_cast %15 : vector<2xf32> to vector<2x1xf32>
    %17 = vector.broadcast %3 : f32 to vector<2x1xf32>
    %18 = arith.addf %16, %17 : vector<2x1xf32>
    %c0_11 = arith.constant 0 : index
    %c0_12 = arith.constant 0 : index
    %19 = vector.load %arg6[%c0_11, %c0_12] : memref<2x32xf32, #tpu.memory_space<vmem>>, vector<2x32xf32>
    %cst_13 = arith.constant dense<0.000000e+00> : vector<2x128xf32>
    %20 = tpu.matmul %19, %0, %cst_13 {dimension_numbers = #tpu.dot_dimension_numbers<[1], [0], [0], [1], [0, 0, 1, 1], [], []>} : vector<2x32xf32>, vector<32x128xf32>, vector<2x128xf32> -> vector<2x128xf32>
    %21 = vector.broadcast %1 : vector<1x128xf32> to vector<2x128xf32>
    %22 = arith.addf %20, %21 : vector<2x128xf32>
    %cst_14 = arith.constant 0.000000e+00 : f32
    %23 = vector.broadcast %cst_14 : f32 to vector<2x128xf32>
    %24 = arith.cmpf ogt, %22, %23 : vector<2x128xf32>
    %cst_15 = arith.constant 0.00999999977 : f32
    %25 = vector.broadcast %cst_15 : f32 to vector<2x128xf32>
    %26 = arith.mulf %25, %22 : vector<2x128xf32>
    %27 = arith.select %24, %22, %26 : vector<2x128xi1>, vector<2x128xf32>
    %28 = vector.broadcast %2 : vector<1x128xf32> to vector<2x128xf32>
    %29 = arith.mulf %27, %28 : vector<2x128xf32>
    %cst_16 = arith.constant dense<0.000000e+00> : vector<2xf32>
    %30 = vector.multi_reduction <add>, %29, %cst_16 [1] : vector<2x128xf32> to vector<2xf32>
    %31 = vector.shape_cast %30 : vector<2xf32> to vector<2x1xf32>
    %32 = vector.broadcast %3 : f32 to vector<2x1xf32>
    %33 = arith.addf %31, %32 : vector<2x1xf32>
    %c0_17 = arith.constant 0 : index
    %c0_18 = arith.constant 0 : index
    %34 = vector.load %arg7[%c0_17, %c0_18] : memref<2x32xf32, #tpu.memory_space<vmem>>, vector<2x32xf32>
    %cst_19 = arith.constant dense<0.000000e+00> : vector<2x128xf32>
    %35 = tpu.matmul %34, %0, %cst_19 {dimension_numbers = #tpu.dot_dimension_numbers<[1], [0], [0], [1], [0, 0, 1, 1], [], []>} : vector<2x32xf32>, vector<32x128xf32>, vector<2x128xf32> -> vector<2x128xf32>
    %36 = vector.broadcast %1 : vector<1x128xf32> to vector<2x128xf32>
    %37 = arith.addf %35, %36 : vector<2x128xf32>
    %cst_20 = arith.constant 0.000000e+00 : f32
    %38 = vector.broadcast %cst_20 : f32 to vector<2x128xf32>
    %39 = arith.cmpf ogt, %37, %38 : vector<2x128xf32>
    %cst_21 = arith.constant 0.00999999977 : f32
    %40 = vector.broadcast %cst_21 : f32 to vector<2x128xf32>
    %41 = arith.mulf %40, %37 : vector<2x128xf32>
    %42 = arith.select %39, %37, %41 : vector<2x128xi1>, vector<2x128xf32>
    %43 = vector.broadcast %2 : vector<1x128xf32> to vector<2x128xf32>
    %44 = arith.mulf %42, %43 : vector<2x128xf32>
    %cst_22 = arith.constant dense<0.000000e+00> : vector<2xf32>
    %45 = vector.multi_reduction <add>, %44, %cst_22 [1] : vector<2x128xf32> to vector<2xf32>
    %46 = vector.shape_cast %45 : vector<2xf32> to vector<2x1xf32>
    %47 = vector.broadcast %3 : f32 to vector<2x1xf32>
    %48 = arith.addf %46, %47 : vector<2x1xf32>
    %49 = arith.maximumf %18, %33 : vector<2x1xf32>
    %50 = arith.maximumf %49, %48 : vector<2x1xf32>
    %51 = arith.subf %18, %50 : vector<2x1xf32>
    %52 = math.exp %51 : vector<2x1xf32>
    %53 = arith.subf %33, %50 : vector<2x1xf32>
    %54 = math.exp %53 : vector<2x1xf32>
    %55 = arith.subf %48, %50 : vector<2x1xf32>
    %56 = math.exp %55 : vector<2x1xf32>
    %57 = arith.addf %52, %54 : vector<2x1xf32>
    %58 = arith.addf %57, %56 : vector<2x1xf32>
    %59 = tpu.reciprocal %58 : vector<2x1xf32> -> vector<2x1xf32>
    %60 = arith.mulf %52, %59 : vector<2x1xf32>
    %61 = arith.mulf %54, %59 : vector<2x1xf32>
    %62 = arith.mulf %56, %59 : vector<2x1xf32>
    %c0_23 = arith.constant 0 : index
    %c0_24 = arith.constant 0 : index
    %63 = vector.load %arg5[%c0_23, %c0_24] : memref<2x32xf32, #tpu.memory_space<vmem>>, vector<2x32xf32>
    %64 = vector.broadcast %60 : vector<2x1xf32> to vector<2x32xf32>
    %65 = arith.mulf %64, %63 : vector<2x32xf32>
    %c0_25 = arith.constant 0 : index
    %c0_26 = arith.constant 0 : index
    %66 = vector.load %arg6[%c0_25, %c0_26] : memref<2x32xf32, #tpu.memory_space<vmem>>, vector<2x32xf32>
    %67 = vector.broadcast %61 : vector<2x1xf32> to vector<2x32xf32>
    %68 = arith.mulf %67, %66 : vector<2x32xf32>
    %69 = arith.addf %65, %68 : vector<2x32xf32>
    %c0_27 = arith.constant 0 : index
    %c0_28 = arith.constant 0 : index
    %70 = vector.load %arg7[%c0_27, %c0_28] : memref<2x32xf32, #tpu.memory_space<vmem>>, vector<2x32xf32>
    %71 = vector.broadcast %62 : vector<2x1xf32> to vector<2x32xf32>
    %72 = arith.mulf %71, %70 : vector<2x32xf32>
    %73 = arith.addf %69, %72 : vector<2x32xf32>
    %c0_29 = arith.constant 0 : index
    %c0_30 = arith.constant 0 : index
    %74 = vector.load %arg8[%c0_29, %c0_30] : memref<2x32xf32, #tpu.memory_space<vmem>>, vector<2x32xf32>
    tpu.vector_store %arg8[%c0_29, %c0_30], %73 {strides = array<i32>} : memref<2x32xf32, #tpu.memory_space<vmem>>, vector<2x32xf32>,
    %c0_31 = arith.constant 0 : index
    %c0_32 = arith.constant 0 : index
    %75 = vector.load %arg9[%c0_31, %c0_32] : memref<2x3xf32, #tpu.memory_space<vmem>>, vector<2x1xf32>
    tpu.vector_store %arg9[%c0_31, %c0_32], %60 {strides = array<i32>} : memref<2x3xf32, #tpu.memory_space<vmem>>, vector<2x1xf32>,
    %c0_33 = arith.constant 0 : index
    %c1 = arith.constant 1 : index
    %76 = vector.load %arg9[%c0_33, %c1] : memref<2x3xf32, #tpu.memory_space<vmem>>, vector<2x1xf32>
    tpu.vector_store %arg9[%c0_33, %c1], %61 {strides = array<i32>} : memref<2x3xf32, #tpu.memory_space<vmem>>, vector<2x1xf32>,
    %c0_34 = arith.constant 0 : index
    %c2 = arith.constant 2 : index
    %77 = vector.load %arg9[%c0_34, %c2] : memref<2x3xf32, #tpu.memory_space<vmem>>, vector<2x1xf32>
    tpu.vector_store %arg9[%c0_34, %c2], %62 {strides = array<i32>} : memref<2x3xf32, #tpu.memory_space<vmem>>, vector<2x1xf32>,
    return
  }
  func.func @transform_0(%arg0: i32) -> (i32, i32) {
    %c0_i32 = arith.constant 0 : i32
    %c0_i32_0 = arith.constant 0 : i32
    %c0_i32_1 = arith.constant 0 : i32
    return %c0_i32, %c0_i32_0 : i32, i32
  }
  func.func @transform_1(%arg0: i32) -> (i32, i32) {
    %c0_i32 = arith.constant 0 : i32
    %c0_i32_0 = arith.constant 0 : i32
    %c0_i32_1 = arith.constant 0 : i32
    return %c0_i32, %c0_i32_0 : i32, i32
  }
  func.func @transform_2(%arg0: i32) -> (i32, i32) {
    %c0_i32 = arith.constant 0 : i32
    %c0_i32_0 = arith.constant 0 : i32
    %c0_i32_1 = arith.constant 0 : i32
    return %c0_i32, %c0_i32_0 : i32, i32
  }
  func.func @transform_3(%arg0: i32) -> i32 {
    %c0_i32 = arith.constant 0 : i32
    %c0_i32_0 = arith.constant 0 : i32
    return %c0_i32 : i32
  }
  func.func @transform_4(%arg0: i32) -> (i32, i32) {
    %c0_i32 = arith.constant 0 : i32
    %c0_i32_0 = arith.constant 0 : i32
    return %arg0, %c0_i32 : i32, i32
  }
  func.func @transform_5(%arg0: i32) -> (i32, i32) {
    %c0_i32 = arith.constant 0 : i32
    %c0_i32_0 = arith.constant 0 : i32
    return %arg0, %c0_i32 : i32, i32
  }
  func.func @transform_6(%arg0: i32) -> (i32, i32) {
    %c0_i32 = arith.constant 0 : i32
    %c0_i32_0 = arith.constant 0 : i32
    return %arg0, %c0_i32 : i32, i32
  }
  func.func @transform_7(%arg0: i32) -> (i32, i32) {
    %c0_i32 = arith.constant 0 : i32
    %c0_i32_0 = arith.constant 0 : i32
    return %arg0, %c0_i32 : i32, i32
  }
  func.func @transform_8(%arg0: i32) -> (i32, i32) {
    %c0_i32 = arith.constant 0 : i32
    %c0_i32_0 = arith.constant 0 : i32
    return %arg0, %c0_i32 : i32, i32
  }
}

</mosaic_0001>

<llo_original>
// kernel: tpu_custom_call.1
$region0: #{tpu_custom_call.1}
  #allocation0 [shape = 'u32[]', space=smem, size = 0x4, offset = 0x4, fixed_abs, tag = 'smem constant byte address 0x4 - core index']
  #allocation1 [shape = 'u32[72,128]{1,0:T(1,128)}', space=vmem, size = 0x9000, scoped, tag = 'internal scratch']
  #allocation2 [shape = 'f32[1]{0:T(128)S(6)}', space=smem, size = 0x200, scoped, tag = 'scoped memory for tpu_custom_call.1']
  %s0 = inlined_call_operand.hbm [shape: f32[32,128], index: 0, kind: input, shape index: {}]
  %s1 = inlined_call_operand.hbm [shape: f32[1,128], index: 1, kind: input, shape index: {}]
  %s2 = inlined_call_operand.hbm [shape: f32[1,128], index: 2, kind: input, shape index: {}]
  %s3 = inlined_call_operand.<no memory space> [shape: f32[1], index: 3, kind: input, shape index: {}]
  %s4 = inlined_call_operand.vmem [shape: f32[2,32], index: 4, kind: input, shape index: {}]
  %s5 = inlined_call_operand.vmem [shape: f32[2,32], index: 5, kind: input, shape index: {}]
  %s6 = inlined_call_operand.vmem [shape: f32[2,32], index: 6, kind: input, shape index: {}]
  %s7 = inlined_call_operand.hbm [shape: f32[2,32], index: 7, kind: output, shape index: {0}]
  %s8 = inlined_call_operand.hbm [shape: f32[2,3], index: 8, kind: output, shape index: {1}]
  %9 = xla_tuple %s7, %s8
  %s10 = sld [smem:[#allocation0]]
  $region58: #{tpu_custom_call.1} parent=0
    _
  %s12 = ssub.s32 1, %s10
  %s13 = scalar_select 0, %s12, %s10
  %14 = sst [smem:[#allocation2]] %s3
  $region1: #{tpu_custom_call.1} parent=0
    #allocation3 [shape = 'u8[16384]{0}', space=vmem, size = 0x4000, scoped, tag = 'input window, operand 0, single buffered']
    #allocation4 [shape = 's32[1]{0}', space=sflag, size = 0x4, scoped, tag = 'scoped memory for tpu_custom_call.1']
    #allocation5 [shape = 's32[1]{0}', space=sflag, size = 0x4, scoped, tag = 'scoped memory for tpu_custom_call.1']
    #allocation6 [shape = 'u8[512]{0}', space=vmem, size = 0x400, scoped, tag = 'input window, operand 1, single buffered']
    #allocation7 [shape = 's32[1]{0}', space=sflag, size = 0x4, scoped, tag = 'scoped memory for tpu_custom_call.1']
    #allocation8 [shape = 'u8[512]{0}', space=vmem, size = 0x400, scoped, tag = 'input window, operand 2, single buffered']
    #allocation9 [shape = 'u8[1024]{0}', space=vmem, size = 0x400, scoped, tag = 'output window, operand 0, single buffered']
    #allocation10 [shape = 'u8[1024]{0}', space=vmem, size = 0x400, scoped, tag = 'output window, operand 1, single buffered']
    #allocation11 [shape = 's32[1]{0}', space=sflag, size = 0x4, scoped, tag = 'scoped memory for tpu_custom_call.1']
    %15 = vsyncpa [#allocation4], 0
    %16 = vsyncpa [#allocation7], 0
    %17 = vsyncpa [#allocation5], 0
    %18 = vsyncpa [#allocation11], 0
    // Predicated region
    $region2: #{tpu_custom_call.1} parent=1 // pred_check
      _
    $region3: #{tpu_custom_call.1} parent=1 // pred_check_branch
      %20 = sbr.rel (0) target = $region5
    $region4: #{tpu_custom_call.1} parent=1 // pred_region
      %22 = vsyncadd [#allocation4], 0
      %s23 = sshll.u32 %s0, 4
      %s24 = int_to_ptr.hbm [resolvable:$true] %s23
      %s25 = sshll.u32 [#allocation3], 4
      %s26 = int_to_ptr.vmem [resolvable:$true] %s25
      %31 = dma.hbm_to_vmem [thread:$0]  %s24, 512, %s26, [#allocation4], 128, 128, 8
    $region5: #{tpu_custom_call.1} parent=1 // pred_fallthru
      _
    // Predicated region
    $region6: #{tpu_custom_call.1} parent=1 // pred_check
      _
    $region7: #{tpu_custom_call.1} parent=1 // pred_check_branch
      %33 = sbr.rel (0) target = $region9
    $region8: #{tpu_custom_call.1} parent=1 // pred_region
      %35 = vsyncadd [#allocation7], 0
      %s37 = sshll.u32 %s1, 4
      %s38 = int_to_ptr.hbm [resolvable:$true] %s37
      %s39 = sshll.u32 [#allocation6], 4
      %s40 = int_to_ptr.vmem [resolvable:$true] %s39
      %42 = dma.hbm_to_vmem [thread:$0]  %s38, 16, %s40, [#allocation7]
    $region9: #{tpu_custom_call.1} parent=1 // pred_fallthru
      _
    // Predicated region
    $region10: #{tpu_custom_call.1} parent=1 // pred_check
      _
    $region11: #{tpu_custom_call.1} parent=1 // pred_check_branch
      %44 = sbr.rel (0) target = $region13
    $region12: #{tpu_custom_call.1} parent=1 // pred_region
      %46 = vsyncadd [#allocation7], 0
      %s48 = sshll.u32 %s2, 4
      %s49 = int_to_ptr.hbm [resolvable:$true] %s48
      %s50 = sshll.u32 [#allocation8], 4
      %s51 = int_to_ptr.vmem [resolvable:$true] %s50
      %53 = dma.hbm_to_vmem [thread:$0]  %s49, 16, %s51, [#allocation7]
    $region13: #{tpu_custom_call.1} parent=1 // pred_fallthru
      _
    // Predicated region
    $region14: #{tpu_custom_call.1} parent=1 // pred_check
      _
    $region15: #{tpu_custom_call.1} parent=1 // pred_check_branch
      %55 = sbr.rel (0) target = $region17
    $region16: #{tpu_custom_call.1} parent=1 // pred_region
      _
    $region17: #{tpu_custom_call.1} parent=1 // pred_fallthru
      _
    // Predicated region
    $region18: #{tpu_custom_call.1} parent=1 // pred_check
      _
    $region19: #{tpu_custom_call.1} parent=1 // pred_check_branch
      %57 = sbr.rel (0) target = $region21
    $region20: #{tpu_custom_call.1} parent=1 // pred_region
      _
    $region21: #{tpu_custom_call.1} parent=1 // pred_fallthru
      _
    // Predicated region
    $region22: #{tpu_custom_call.1} parent=1 // pred_check
      _
    $region23: #{tpu_custom_call.1} parent=1 // pred_check_branch
      %59 = sbr.rel (0) target = $region25
    $region24: #{tpu_custom_call.1} parent=1 // pred_region
      _
    $region25: #{tpu_custom_call.1} parent=1 // pred_fallthru
      _
    // Predicated region
    $region26: #{tpu_custom_call.1} parent=1 // pred_check
      _
    $region27: #{tpu_custom_call.1} parent=1 // pred_check_branch
      %61 = sbr.rel (0) target = $region29
    $region28: #{tpu_custom_call.1} parent=1 // pred_region
      _
    $region29: #{tpu_custom_call.1} parent=1 // pred_fallthru
      _
    // Predicated region
    $region30: #{tpu_custom_call.1} parent=1 // pred_check
      _
    $region31: #{tpu_custom_call.1} parent=1 // pred_check_branch
      %63 = sbr.rel (0) target = $region33
    $region32: #{tpu_custom_call.1} parent=1 // pred_region
      %65 = dma.done [#allocation4], 512
    $region33: #{tpu_custom_call.1} parent=1 // pred_fallthru
      _
    // Predicated region
    $region34: #{tpu_custom_call.1} parent=1 // pred_check
      _
    $region35: #{tpu_custom_call.1} parent=1 // pred_check_branch
      %67 = sbr.rel (0) target = $region37
    $region36: #{tpu_custom_call.1} parent=1 // pred_region
      %69 = dma.done [#allocation7], 16
    $region37: #{tpu_custom_call.1} parent=1 // pred_fallthru
      _
    // Predicated region
    $region38: #{tpu_custom_call.1} parent=1 // pred_check
      _
    $region39: #{tpu_custom_call.1} parent=1 // pred_check_branch
      %71 = sbr.rel (0) target = $region41
    $region40: #{tpu_custom_call.1} parent=1 // pred_region
      %73 = dma.done [#allocation7], 16
    $region41: #{tpu_custom_call.1} parent=1 // pred_fallthru
      _
    %v74 = vld [vmem:[#allocation3] sm:$0xff]
    %v75 = vld [vmem:[#allocation3 + $0x8] sm:$0xff]
    %v76 = vld [vmem:[#allocation3 + $0x10] sm:$0xff]
    %v77 = vld [vmem:[#allocation3 + $0x18] sm:$0xff]
    %v78 = vld [vmem:[#allocation6] sm:$0x1]
    %v79 = vld [vmem:[#allocation8] sm:$0x1]
    %s80 = sld [smem:[#allocation2]]
    %v81 = vld [vmem:[%s4] sm:$0x3]
    %v83 = vperm.slane %v78, 0
    %vm85 = vcmask 261120
    %v87 = vsel %vm85, %v81, 0
    %89 = vmatpush.msra.mxu0 0.0
    %90 = vmatpush.msra.mxu0 0.0
    %91 = vmatpush.msra.mxu0 0.0
    %92 = vmatpush.msra.mxu0 0.0
    %93 = vmatpush.msra.mxu0 0.0
    %94 = vmatpush.msra.mxu0 0.0
    %95 = vmatpush.msra.mxu0 0.0
    %96 = vmatpush.msra.mxu0 0.0
    %97 = vmatpush.msra.mxu0 0.0
    %98 = vmatpush.msra.mxu0 0.0
    %99 = vmatpush.msra.mxu0 0.0
    %100 = vmatpush.msra.mxu0 0.0
    %101 = vmatpush.msra.mxu0 %v77
    %102 = vmatpush.msra.mxu0 %v76
    %103 = vmatpush.msra.mxu0 %v75
    %104 = vmatpush.msra.mxu0 %v74
    %105 = vmatmul.f32.gmra.mxu0 %v87
    %v106 = vpop.f32.mrf.mxu0
    %v107 = vadd.f32 %v83, %v106
    %108 = vdwg.mxu0
    %vm109 = vcmp.gt.f32.partialorder %v107, 0.0
    %v110 = vmul.f32 %v107, 0.01
    %v111 = vsel %vm109, %v107, %v110
    %v113 = vperm.slane %v79, 0
    %v115 = vmul.f32 %v111, %v113
    %vm116 = vcmask 1041408
    %v117 = vsel %vm116, %v115, 0.0
    %118 = vadd.xlane.f32.xlu0 %v117
    %v119 = vpop.xlane.xlu0 %118
    %v120 = vstv %s80
    %v121 = vadd.f32 %v119, %v120
    %v122 = vld [vmem:[%s5] sm:$0x3]
    %v124 = vsel %vm85, %v122, 0
    %126 = vmatpush.msra.mxu0 0.0
    %127 = vmatpush.msra.mxu0 0.0
    %128 = vmatpush.msra.mxu0 0.0
    %129 = vmatpush.msra.mxu0 0.0
    %130 = vmatpush.msra.mxu0 0.0
    %131 = vmatpush.msra.mxu0 0.0
    %132 = vmatpush.msra.mxu0 0.0
    %133 = vmatpush.msra.mxu0 0.0
    %134 = vmatpush.msra.mxu0 0.0
    %135 = vmatpush.msra.mxu0 0.0
    %136 = vmatpush.msra.mxu0 0.0
    %137 = vmatpush.msra.mxu0 0.0
    %138 = vmatpush.msra.mxu0 %v77
    %139 = vmatpush.msra.mxu0 %v76
    %140 = vmatpush.msra.mxu0 %v75
    %141 = vmatpush.msra.mxu0 %v74
    %142 = vmatmul.f32.gmra.mxu0 %v124
    %v143 = vpop.f32.mrf.mxu0
    %v144 = vadd.f32 %v83, %v143
    %145 = vdwg.mxu0
    %vm146 = vcmp.gt.f32.partialorder %v144, 0.0
    %v147 = vmul.f32 %v144, 0.01
    %v148 = vsel %vm146, %v144, %v147
    %v149 = vmul.f32 %v148, %v113
    %v150 = vsel %vm116, %v149, 0.0
    %151 = vadd.xlane.f32.xlu0 %v150
    %v152 = vpop.xlane.xlu0 %151
    %v153 = vadd.f32 %v152, %v120
    %v154 = vld [vmem:[%s6] sm:$0x3]
    %v156 = vsel %vm85, %v154, 0
    %158 = vmatpush.msra.mxu0 0.0
    %159 = vmatpush.msra.mxu0 0.0
    %160 = vmatpush.msra.mxu0 0.0
    %161 = vmatpush.msra.mxu0 0.0
    %162 = vmatpush.msra.mxu0 0.0
    %163 = vmatpush.msra.mxu0 0.0
    %164 = vmatpush.msra.mxu0 0.0
    %165 = vmatpush.msra.mxu0 0.0
    %166 = vmatpush.msra.mxu0 0.0
    %167 = vmatpush.msra.mxu0 0.0
    %168 = vmatpush.msra.mxu0 0.0
    %169 = vmatpush.msra.mxu0 0.0
    %170 = vmatpush.msra.mxu0 %v77
    %171 = vmatpush.msra.mxu0 %v76
    %172 = vmatpush.msra.mxu0 %v75
    %173 = vmatpush.msra.mxu0 %v74
    %174 = vmatmul.f32.gmra.mxu0 %v156
    %v175 = vpop.f32.mrf.mxu0
    %v176 = vadd.f32 %v83, %v175
    %177 = vdwg.mxu0
    %vm178 = vcmp.gt.f32.partialorder %v176, 0.0
    %v179 = vmul.f32 %v176, 0.01
    %v180 = vsel %vm178, %v176, %v179
    %v181 = vmul.f32 %v180, %v113
    %v182 = vsel %vm116, %v181, 0.0
    %183 = vadd.xlane.f32.xlu0 %v182
    %v184 = vpop.xlane.xlu0 %183
    %v185 = vadd.f32 %v184, %v120
    %v186 = vmax.f32 %v121, %v153
    %v187 = vmax.f32 %v186, %v185
    %v188 = vsub.f32 %v121, %v187
    %v189 = vmul.f32 %v188, 1.442695
    %v190 = vpow.pop %v189
    %v191 = vsub.f32 %v153, %v187
    %v192 = vmul.f32 %v191, 1.442695
    %v193 = vpow.pop %v192
    %v194 = vsub.f32 %v185, %v187
    %v195 = vmul.f32 %v194, 1.442695
    %v196 = vpow.pop %v195
    %v197 = vadd.f32 %v190, %v193
    %v198 = vadd.f32 %v197, %v196
    %v199 = vrcp.pop %v198
    %v200 = vmul.f32 %v198, %v199
    %v201 = vsub.f32 1.0, %v200
    %v202 = vmul.f32 %v199, %v201
    %v203 = vadd.f32 %v199, %v202
    %vm204 = vweird.f32 %v198
    %vm205 = vweird.f32 %v199
    %vm206 = vmor %vm204, %vm205
    %v207 = vsel %vm206, %v199, %v203
    %v208 = vand.u32 2147483647, %v198
    %vm209 = vcmp.eq.f32.partialorder %v208, 8.507059e+37
    %v210 = vand.u32 %v198, 2147483648
    %v211 = vor.u32 1.1754944e-38, %v210
    %v212 = vsel %vm209, %v211, %v207
    %v213 = vmul.f32 %v190, %v212
    %v214 = vmul.f32 %v193, %v212
    %v215 = vmul.f32 %v196, %v212
    %v216 = vmul.f32 %v213, %v81
    %v217 = vmul.f32 %v214, %v122
    %v218 = vadd.f32 %v216, %v217
    %v219 = vmul.f32 %v215, %v154
    %v220 = vadd.f32 %v218, %v219
    %vm221 = vcmask 254976
    %222 = vst.msk [vmem:[#allocation9] sm:$0x3] %vm221, %v220
    %vm223 = vcmask 1024
    %224 = vst.msk [vmem:[#allocation10] sm:$0x3] %vm223, %v213
    %vm225 = vcmask 9224
    %226 = vst.msk [vmem:[#allocation10] sm:$0x3] %vm225, %v214
    %vm227 = vcmask 17424
    %228 = vst.msk [vmem:[#allocation10] sm:$0x3] %vm227, %v215
    // Predicated region
    $region42: #{tpu_custom_call.1} parent=1 // pred_check
      _
    $region43: #{tpu_custom_call.1} parent=1 // pred_check_branch
      %230 = sbr.rel (0) target = $region45
    $region44: #{tpu_custom_call.1} parent=1 // pred_region
      %232 = vsyncadd [#allocation5], 0
      %s234 = sshll.u32 [#allocation9], 4
      %s235 = int_to_ptr.vmem [resolvable:$true] %s234
      %s236 = sshll.u32 %s7, 4
      %s237 = int_to_ptr.hbm [resolvable:$true] %s236
      %239 = dma.vmem_to_hbm [thread:$0]  %s235, 32, %s237, [#allocation5]
    $region45: #{tpu_custom_call.1} parent=1 // pred_fallthru
      _
    // Predicated region
    $region46: #{tpu_custom_call.1} parent=1 // pred_check
      _
    $region47: #{tpu_custom_call.1} parent=1 // pred_check_branch
      %241 = sbr.rel (0) target = $region49
    $region48: #{tpu_custom_call.1} parent=1 // pred_region
      %243 = vsyncadd [#allocation11], 0
      %s245 = sshll.u32 [#allocation10], 4
      %s246 = int_to_ptr.vmem [resolvable:$true] %s245
      %s247 = sshll.u32 %s8, 4
      %s248 = int_to_ptr.hbm [resolvable:$true] %s247
      %250 = dma.vmem_to_hbm [thread:$0]  %s246, 32, %s248, [#allocation11]
    $region49: #{tpu_custom_call.1} parent=1 // pred_fallthru
      _
    // Predicated region
    $region50: #{tpu_custom_call.1} parent=1 // pred_check
      _
    $region51: #{tpu_custom_call.1} parent=1 // pred_check_branch
      %252 = sbr.rel (0) target = $region53
    $region52: #{tpu_custom_call.1} parent=1 // pred_region
      %254 = dma.done [#allocation5], 32
    $region53: #{tpu_custom_call.1} parent=1 // pred_fallthru
      _
    // Predicated region
    $region54: #{tpu_custom_call.1} parent=1 // pred_check
      _
    $region55: #{tpu_custom_call.1} parent=1 // pred_check_branch
      %256 = sbr.rel (0) target = $region57
    $region56: #{tpu_custom_call.1} parent=1 // pred_region
      %258 = dma.done [#allocation11], 32
    $region57: #{tpu_custom_call.1} parent=1 // pred_fallthru
      _
    %259 = vsyncpa [#allocation4], 1
    %260 = vsyncpa [#allocation7], 1
    %261 = vsyncpa [#allocation5], 1
    %262 = vsyncpa [#allocation11], 1

// kernel: tpu_custom_call.1
$region0: #{tpu_custom_call.1}
  #allocation0 [shape = 'u32[]', space=smem, size = 0x4, offset = 0x4, fixed_abs, tag = 'smem constant byte address 0x4 - core index']
  #allocation1 [shape = 'u32[72,128]{1,0:T(1,128)}', space=vmem, size = 0x9000, scoped, tag = 'internal scratch']
  #allocation2 [shape = 'f32[1]{0:T(128)S(6)}', space=smem, size = 0x200, scoped, tag = 'scoped memory for tpu_custom_call.1']
  %s0 = inlined_call_operand.hbm [shape: f32[32,128], index: 0, kind: input, shape index: {}]
  %s1 = inlined_call_operand.hbm [shape: f32[1,128], index: 1, kind: input, shape index: {}]
  %s2 = inlined_call_operand.hbm [shape: f32[1,128], index: 2, kind: input, shape index: {}]
  %s3 = inlined_call_operand.<no memory space> [shape: f32[1], index: 3, kind: input, shape index: {}]
  %s4 = inlined_call_operand.vmem [shape: f32[2,32], index: 4, kind: input, shape index: {}]
  %s5 = inlined_call_operand.vmem [shape: f32[2,32], index: 5, kind: input, shape index: {}]
  %s6 = inlined_call_operand.vmem [shape: f32[2,32], index: 6, kind: input, shape index: {}]
  %s7 = inlined_call_operand.hbm [shape: f32[2,32], index: 7, kind: output, shape index: {0}]
  %s8 = inlined_call_operand.hbm [shape: f32[2,3], index: 8, kind: output, shape index: {1}]
  %9 = xla_tuple %s7, %s8
  %s10 = sld [smem:[#allocation0]]
  $region58: #{tpu_custom_call.1} parent=0
    _
  %s12 = ssub.s32 1, %s10
  %s13 = scalar_select 0, %s12, %s10
  %14 = sst [smem:[#allocation2]] %s3
  $region1: #{tpu_custom_call.1} parent=0
    #allocation3 [shape = 'u8[16384]{0}', space=vmem, size = 0x4000, scoped, tag = 'input window, operand 0, single buffered']
    #allocation4 [shape = 's32[1]{0}', space=sflag, size = 0x4, scoped, tag = 'scoped memory for tpu_custom_call.1']
    #allocation5 [shape = 's32[1]{0}', space=sflag, size = 0x4, scoped, tag = 'scoped memory for tpu_custom_call.1']
    #allocation6 [shape = 'u8[512]{0}', space=vmem, size = 0x400, scoped, tag = 'input window, operand 1, single buffered']
    #allocation7 [shape = 's32[1]{0}', space=sflag, size = 0x4, scoped, tag = 'scoped memory for tpu_custom_call.1']
    #allocation8 [shape = 'u8[512]{0}', space=vmem, size = 0x400, scoped, tag = 'input window, operand 2, single buffered']
    #allocation9 [shape = 'u8[1024]{0}', space=vmem, size = 0x400, scoped, tag = 'output window, operand 0, single buffered']
    #allocation10 [shape = 'u8[1024]{0}', space=vmem, size = 0x400, scoped, tag = 'output window, operand 1, single buffered']
    #allocation11 [shape = 's32[1]{0}', space=sflag, size = 0x4, scoped, tag = 'scoped memory for tpu_custom_call.1']
    %15 = vsyncpa [#allocation4], 0
    %16 = vsyncpa [#allocation7], 0
    %17 = vsyncpa [#allocation5], 0
    %18 = vsyncpa [#allocation11], 0
    // Predicated region
    $region2: #{tpu_custom_call.1} parent=1 // pred_check
      _
    $region3: #{tpu_custom_call.1} parent=1 // pred_check_branch
      %20 = sbr.rel (0) target = $region5
    $region4: #{tpu_custom_call.1} parent=1 // pred_region
      %22 = vsyncadd [#allocation4], 0
      %s23 = sshll.u32 %s0, 4
      %s24 = int_to_ptr.hbm [resolvable:$true] %s23
      %s25 = sshll.u32 [#allocation3], 4
      %s26 = int_to_ptr.vmem [resolvable:$true] %s25
      %31 = dma.hbm_to_vmem [thread:$0]  %s24, 512, %s26, [#allocation4], 128, 128, 8
    $region5: #{tpu_custom_call.1} parent=1 // pred_fallthru
      _
    // Predicated region
    $region6: #{tpu_custom_call.1} parent=1 // pred_check
      _
    $region7: #{tpu_custom_call.1} parent=1 // pred_check_branch
      %33 = sbr.rel (0) target = $region9
    $region8: #{tpu_custom_call.1} parent=1 // pred_region
      %35 = vsyncadd [#allocation7], 0
      %s37 = sshll.u32 %s1, 4
      %s38 = int_to_ptr.hbm [resolvable:$true] %s37
      %s39 = sshll.u32 [#allocation6], 4
      %s40 = int_to_ptr.vmem [resolvable:$true] %s39
      %42 = dma.hbm_to_vmem [thread:$0]  %s38, 16, %s40, [#allocation7]
    $region9: #{tpu_custom_call.1} parent=1 // pred_fallthru
      _
    // Predicated region
    $region10: #{tpu_custom_call.1} parent=1 // pred_check
      _
    $region11: #{tpu_custom_call.1} parent=1 // pred_check_branch
      %44 = sbr.rel (0) target = $region13
    $region12: #{tpu_custom_call.1} parent=1 // pred_region
      %46 = vsyncadd [#allocation7], 0
      %s48 = sshll.u32 %s2, 4
      %s49 = int_to_ptr.hbm [resolvable:$true] %s48
      %s50 = sshll.u32 [#allocation8], 4
      %s51 = int_to_ptr.vmem [resolvable:$true] %s50
      %53 = dma.hbm_to_vmem [thread:$0]  %s49, 16, %s51, [#allocation7]
    $region13: #{tpu_custom_call.1} parent=1 // pred_fallthru
      _
    // Predicated region
    $region14: #{tpu_custom_call.1} parent=1 // pred_check
      _
    $region15: #{tpu_custom_call.1} parent=1 // pred_check_branch
      %55 = sbr.rel (0) target = $region17
    $region16: #{tpu_custom_call.1} parent=1 // pred_region
      _
    $region17: #{tpu_custom_call.1} parent=1 // pred_fallthru
      _
    // Predicated region
    $region18: #{tpu_custom_call.1} parent=1 // pred_check
      _
    $region19: #{tpu_custom_call.1} parent=1 // pred_check_branch
      %57 = sbr.rel (0) target = $region21
    $region20: #{tpu_custom_call.1} parent=1 // pred_region
      _
    $region21: #{tpu_custom_call.1} parent=1 // pred_fallthru
      _
    // Predicated region
    $region22: #{tpu_custom_call.1} parent=1 // pred_check
      _
    $region23: #{tpu_custom_call.1} parent=1 // pred_check_branch
      %59 = sbr.rel (0) target = $region25
    $region24: #{tpu_custom_call.1} parent=1 // pred_region
      _
    $region25: #{tpu_custom_call.1} parent=1 // pred_fallthru
      _
    // Predicated region
    $region26: #{tpu_custom_call.1} parent=1 // pred_check
      _
    $region27: #{tpu_custom_call.1} parent=1 // pred_check_branch
      %61 = sbr.rel (0) target = $region29
    $region28: #{tpu_custom_call.1} parent=1 // pred_region
      _
    $region29: #{tpu_custom_call.1} parent=1 // pred_fallthru
      _
    // Predicated region
    $region30: #{tpu_custom_call.1} parent=1 // pred_check
      _
    $region31: #{tpu_custom_call.1} parent=1 // pred_check_branch
      %63 = sbr.rel (0) target = $region33
    $region32: #{tpu_custom_call.1} parent=1 // pred_region
      %65 = dma.done [#allocation4], 512
    $region33: #{tpu_custom_call.1} parent=1 // pred_fallthru
      _
    // Predicated region
    $region34: #{tpu_custom_call.1} parent=1 // pred_check
      _
    $region35: #{tpu_custom_call.1} parent=1 // pred_check_branch
      %67 = sbr.rel (0) target = $region37
    $region36: #{tpu_custom_call.1} parent=1 // pred_region
      %69 = dma.done [#allocation7], 16
    $region37: #{tpu_custom_call.1} parent=1 // pred_fallthru
      _
    // Predicated region
    $region38: #{tpu_custom_call.1} parent=1 // pred_check
      _
    $region39: #{tpu_custom_call.1} parent=1 // pred_check_branch
      %71 = sbr.rel (0) target = $region41
    $region40: #{tpu_custom_call.1} parent=1 // pred_region
      %73 = dma.done [#allocation7], 16
    $region41: #{tpu_custom_call.1} parent=1 // pred_fallthru
      _
    %v74 = vld [vmem:[#allocation3] sm:$0xff]
    %v75 = vld [vmem:[#allocation3 + $0x8] sm:$0xff]
    %v76 = vld [vmem:[#allocation3 + $0x10] sm:$0xff]
    %v77 = vld [vmem:[#allocation3 + $0x18] sm:$0xff]
    %v78 = vld [vmem:[#allocation6] sm:$0x1]
    %v79 = vld [vmem:[#allocation8] sm:$0x1]
    %s80 = sld [smem:[#allocation2]]
    %v81 = vld [vmem:[%s4] sm:$0x3]
    %v83 = vperm.slane %v78, 0
    %vm85 = vcmask 261120
    %v87 = vsel %vm85, %v81, 0
    %89 = vmatpush.msra.mxu0 0.0
    %90 = vmatpush.msra.mxu0 0.0
    %91 = vmatpush.msra.mxu0 0.0
    %92 = vmatpush.msra.mxu0 0.0
    %93 = vmatpush.msra.mxu0 0.0
    %94 = vmatpush.msra.mxu0 0.0
    %95 = vmatpush.msra.mxu0 0.0
    %96 = vmatpush.msra.mxu0 0.0
    %97 = vmatpush.msra.mxu0 0.0
    %98 = vmatpush.msra.mxu0 0.0
    %99 = vmatpush.msra.mxu0 0.0
    %100 = vmatpush.msra.mxu0 0.0
    %101 = vmatpush.msra.mxu0 %v77
    %102 = vmatpush.msra.mxu0 %v76
    %103 = vmatpush.msra.mxu0 %v75
    %104 = vmatpush.msra.mxu0 %v74
    %105 = vmatmul.f32.gmra.mxu0 %v87
    %v106 = vpop.f32.mrf.mxu0
    %v107 = vadd.f32 %v83, %v106
    %108 = vdwg.mxu0
    %vm109 = vcmp.gt.f32.partialorder %v107, 0.0
    %v110 = vmul.f32 %v107, 0.01
    %v111 = vsel %vm109, %v107, %v110
    %v113 = vperm.slane %v79, 0
    %v115 = vmul.f32 %v111, %v113
    %vm116 = vcmask 1041408
    %v117 = vsel %vm116, %v115, 0.0
    %118 = vadd.xlane.f32.xlu0 %v117
    %v119 = vpop.xlane.xlu0 %118
    %v120 = vstv %s80
    %v121 = vadd.f32 %v119, %v120
    %v122 = vld [vmem:[%s5] sm:$0x3]
    %v124 = vsel %vm85, %v122, 0
    %126 = vmatpush.msra.mxu0 0.0
    %127 = vmatpush.msra.mxu0 0.0
    %128 = vmatpush.msra.mxu0 0.0
    %129 = vmatpush.msra.mxu0 0.0
    %130 = vmatpush.msra.mxu0 0.0
    %131 = vmatpush.msra.mxu0 0.0
    %132 = vmatpush.msra.mxu0 0.0
    %133 = vmatpush.msra.mxu0 0.0
    %134 = vmatpush.msra.mxu0 0.0
    %135 = vmatpush.msra.mxu0 0.0
    %136 = vmatpush.msra.mxu0 0.0
    %137 = vmatpush.msra.mxu0 0.0
    %138 = vmatpush.msra.mxu0 %v77
    %139 = vmatpush.msra.mxu0 %v76
    %140 = vmatpush.msra.mxu0 %v75
    %141 = vmatpush.msra.mxu0 %v74
    %142 = vmatmul.f32.gmra.mxu0 %v124
    %v143 = vpop.f32.mrf.mxu0
    %v144 = vadd.f32 %v83, %v143
    %145 = vdwg.mxu0
    %vm146 = vcmp.gt.f32.partialorder %v144, 0.0
    %v147 = vmul.f32 %v144, 0.01
    %v148 = vsel %vm146, %v144, %v147
    %v149 = vmul.f32 %v148, %v113
    %v150 = vsel %vm116, %v149, 0.0
    %151 = vadd.xlane.f32.xlu0 %v150
    %v152 = vpop.xlane.xlu0 %151
    %v153 = vadd.f32 %v152, %v120
    %v154 = vld [vmem:[%s6] sm:$0x3]
    %v156 = vsel %vm85, %v154, 0
    %158 = vmatpush.msra.mxu0 0.0
    %159 = vmatpush.msra.mxu0 0.0
    %160 = vmatpush.msra.mxu0 0.0
    %161 = vmatpush.msra.mxu0 0.0
    %162 = vmatpush.msra.mxu0 0.0
    %163 = vmatpush.msra.mxu0 0.0
    %164 = vmatpush.msra.mxu0 0.0
    %165 = vmatpush.msra.mxu0 0.0
    %166 = vmatpush.msra.mxu0 0.0
    %167 = vmatpush.msra.mxu0 0.0
    %168 = vmatpush.msra.mxu0 0.0
    %169 = vmatpush.msra.mxu0 0.0
    %170 = vmatpush.msra.mxu0 %v77
    %171 = vmatpush.msra.mxu0 %v76
    %172 = vmatpush.msra.mxu0 %v75
    %173 = vmatpush.msra.mxu0 %v74
    %174 = vmatmul.f32.gmra.mxu0 %v156
    %v175 = vpop.f32.mrf.mxu0
    %v176 = vadd.f32 %v83, %v175
    %177 = vdwg.mxu0
    %vm178 = vcmp.gt.f32.partialorder %v176, 0.0
    %v179 = vmul.f32 %v176, 0.01
    %v180 = vsel %vm178, %v176, %v179
    %v181 = vmul.f32 %v180, %v113
    %v182 = vsel %vm116, %v181, 0.0
    %183 = vadd.xlane.f32.xlu0 %v182
    %v184 = vpop.xlane.xlu0 %183
    %v185 = vadd.f32 %v184, %v120
    %v186 = vmax.f32 %v121, %v153
    %v187 = vmax.f32 %v186, %v185
    %v188 = vsub.f32 %v121, %v187
    %v189 = vmul.f32 %v188, 1.442695
    %v190 = vpow.pop %v189
    %v191 = vsub.f32 %v153, %v187
    %v192 = vmul.f32 %v191, 1.442695
    %v193 = vpow.pop %v192
    %v194 = vsub.f32 %v185, %v187
    %v195 = vmul.f32 %v194, 1.442695
    %v196 = vpow.pop %v195
    %v197 = vadd.f32 %v190, %v193
    %v198 = vadd.f32 %v197, %v196
    %v199 = vrcp.pop %v198
    %v200 = vmul.f32 %v198, %v199
    %v201 = vsub.f32 1.0, %v200
    %v202 = vmul.f32 %v199, %v201
    %v203 = vadd.f32 %v199, %v202
    %vm204 = vweird.f32 %v198
    %vm205 = vweird.f32 %v199
    %vm206 = vmor %vm204, %vm205
    %v207 = vsel %vm206, %v199, %v203
    %v208 = vand.u32 2147483647, %v198
    %vm209 = vcmp.eq.f32.partialorder %v208, 8.507059e+37
    %v210 = vand.u32 %v198, 2147483648
    %v211 = vor.u32 1.1754944e-38, %v210
    %v212 = vsel %vm209, %v211, %v207
    %v213 = vmul.f32 %v190, %v212
    %v214 = vmul.f32 %v193, %v212
    %v215 = vmul.f32 %v196, %v212
    %v216 = vmul.f32 %v213, %v81
    %v217 = vmul.f32 %v214, %v122
    %v218 = vadd.f32 %v216, %v217
    %v219 = vmul.f32 %v215, %v154
    %v220 = vadd.f32 %v218, %v219
    %vm221 = vcmask 254976
    %222 = vst.msk [vmem:[#allocation9] sm:$0x3] %vm221, %v220
    %vm223 = vcmask 1024
    %224 = vst.msk [vmem:[#allocation10] sm:$0x3] %vm223, %v213
    %vm225 = vcmask 9224
    %226 = vst.msk [vmem:[#allocation10] sm:$0x3] %vm225, %v214
    %vm227 = vcmask 17424
    %228 = vst.msk [vmem:[#allocation10] sm:$0x3] %vm227, %v215
    // Predicated region
    $region42: #{tpu_custom_call.1} parent=1 // pred_check
      _
    $region43: #{tpu_custom_call.1} parent=1 // pred_check_branch
      %230 = sbr.rel (0) target = $region45
    $region44: #{tpu_custom_call.1} parent=1 // pred_region
      %232 = vsyncadd [#allocation5], 0
      %s234 = sshll.u32 [#allocation9], 4
      %s235 = int_to_ptr.vmem [resolvable:$true] %s234
      %s236 = sshll.u32 %s7, 4
      %s237 = int_to_ptr.hbm [resolvable:$true] %s236
      %239 = dma.vmem_to_hbm [thread:$0]  %s235, 32, %s237, [#allocation5]
    $region45: #{tpu_custom_call.1} parent=1 // pred_fallthru
      _
    // Predicated region
    $region46: #{tpu_custom_call.1} parent=1 // pred_check
      _
    $region47: #{tpu_custom_call.1} parent=1 // pred_check_branch
      %241 = sbr.rel (0) target = $region49
    $region48: #{tpu_custom_call.1} parent=1 // pred_region
      %243 = vsyncadd [#allocation11], 0
      %s245 = sshll.u32 [#allocation10], 4
      %s246 = int_to_ptr.vmem [resolvable:$true] %s245
      %s247 = sshll.u32 %s8, 4
      %s248 = int_to_ptr.hbm [resolvable:$true] %s247
      %250 = dma.vmem_to_hbm [thread:$0]  %s246, 32, %s248, [#allocation11]
    $region49: #{tpu_custom_call.1} parent=1 // pred_fallthru
      _
    // Predicated region
    $region50: #{tpu_custom_call.1} parent=1 // pred_check
      _
    $region51: #{tpu_custom_call.1} parent=1 // pred_check_branch
      %252 = sbr.rel (0) target = $region53
    $region52: #{tpu_custom_call.1} parent=1 // pred_region
      %254 = dma.done [#allocation5], 32
    $region53: #{tpu_custom_call.1} parent=1 // pred_fallthru
      _
    // Predicated region
    $region54: #{tpu_custom_call.1} parent=1 // pred_check
      _
    $region55: #{tpu_custom_call.1} parent=1 // pred_check_branch
      %256 = sbr.rel (0) target = $region57
    $region56: #{tpu_custom_call.1} parent=1 // pred_region
      %258 = dma.done [#allocation11], 32
    $region57: #{tpu_custom_call.1} parent=1 // pred_fallthru
      _
    %259 = vsyncpa [#allocation4], 1
    %260 = vsyncpa [#allocation7], 1
    %261 = vsyncpa [#allocation5], 1
    %262 = vsyncpa [#allocation11], 1

</llo_original>
